<compile_context>
chip_gen: v6e
topology: v6e:2x2x1
jax: 0.10.0
libtpu: 0.0.40
codegen_flags: <defaults>
</compile_context>

<pallas_src>
import functools

import jax
import jax.numpy as jnp
from jax.experimental import pallas as pl
from jax.experimental.pallas import tpu as pltpu

_NEG_BIG = -1e30  # finite "-inf" so select/max never manufactures NaN


def _round_up(v, m):
    return (v + m - 1) // m * m


def _fit_tile_n(requested, n, c_in, cols, b_pad, c_out_pad, vmem_limit_bytes):
    """Largest tile_n (multiple of 128, <= requested) whose working set fits the VMEM budget.

    Budget model (bytes):
      fixed  : resident out (b_pad*c_out_pad f32) + fused weights (2 bufs, bf16) + biases + m/l
      per-n  : 2 x-input buffers (f32) + 2 index buffers + hx (tile_n*cols f32)
               + ~4 live (b_pad, tile_n) f32 intermediates (mask/masked/p/where temps)
    Uses 75% of vmem_limit_bytes to leave headroom for compiler temporaries — this is the
    explicit v7x-aware formula (64 MiB physical VMEM) requested by the perf review.
    """
    budget = int(vmem_limit_bytes * 0.75)
    fixed = b_pad * c_out_pad * 4 + 2 * c_in * cols * 2 + 8 * cols + 2 * b_pad * 4 + 4096
    per_n = 2 * c_in * 4 + 2 * 4 + cols * 4 + 4 * b_pad * 4
    max_tile = max((budget - fixed) // per_n, 128)
    tile_n = min(requested, _round_up(n, 128), max_tile)
    return max(128, (tile_n // 128) * 128)


def _attn_agg_kernel(x_ref, idx_ref, wcat_ref, bcat_ref, w2_ref, b2_ref,
                     out_ref, m_ref, l_ref, *, n_total, scatter_bf16):
    i = pl.program_id(0)
    n_steps = pl.num_programs(0)

    tile_n = x_ref.shape[0]
    b_pad = out_ref.shape[0]
    c_hid_pad = w2_ref.shape[1]
    base = i * tile_n
    ragged = (n_total % tile_n) != 0  # static: only emit masking code if needed

    @pl.when(i == 0)
    def _init():
        m_ref[...] = jnp.full_like(m_ref, _NEG_BIG)
        l_ref[...] = jnp.zeros_like(l_ref)
        out_ref[...] = jnp.zeros_like(out_ref)

    # ---- load x tile (f32 in HBM), sanitize ragged rows, cast to bf16 for the MXU ----
    x = x_ref[...]                                                       # (tile_n, C_in) f32
    if ragged:
        # Rows past the real N hold unspecified data (ragged last block): zero them so no
        # NaN/Inf can leak through the matmuls (their alpha is forced to 0 below anyway).
        row_valid = (jax.lax.broadcasted_iota(jnp.int32, (tile_n, 1), 0) + base) < n_total
        x = jnp.where(row_valid, x, 0.0)
    x = x.astype(jnp.bfloat16)

    # ---- fused transform: single bf16 MXU pass over x for gate-hidden AND transform ----
    hx = jnp.dot(x, wcat_ref[...], preferred_element_type=jnp.float32)   # (tile_n, Chp+Cop)
    hx = jnp.maximum(hx + bcat_ref[...], 0.0)
    h = hx[:, :c_hid_pad]                                                # (tile_n, C_hid_pad)
    xt = hx[:, c_hid_pad:]                                               # (tile_n, C_out_pad)

    # ---- gate in row layout (nodes on lanes): contract dim 1 of both (no h.T relayout) ----
    # TODO(synk): Dropout inside gate_nn/transform_nn is a no-op here (eval mode).
    gate8 = jax.lax.dot_general(w2_ref[...], h, (((1,), (1,)), ((), ())),
                                preferred_element_type=jnp.float32)      # (8, tile_n)
    gate_row = gate8[0:1, :] + b2_ref[...]                               # (1, tile_n)

    # ---- membership mask in (B, tile_n) layout: feeds max, gather and scatter ----
    seg = jax.lax.broadcasted_iota(jnp.int32, (b_pad, tile_n), 0)
    mask = seg == idx_ref[...]                                           # (B_pad, tile_n) bool
    if ragged:
        lane_valid = (jax.lax.broadcasted_iota(jnp.int32, (1, tile_n), 1) + base) < n_total
        mask = jnp.logical_and(mask, lane_valid)

    # ---- online per-segment max ----
    masked = jnp.where(mask, gate_row, _NEG_BIG)
    m_tile = jnp.max(masked, axis=-1, keepdims=True)                     # (B_pad, 1)
    m_old = m_ref[...]
    m_new = jnp.maximum(m_old, m_tile)
    corr = jnp.exp(m_old - m_new)                                        # (B_pad, 1): B exps
    m_ref[...] = m_new

    # ---- per-node exp on (1, tile_n) (N exps total, not N*B), deferred normalization ----
    gathered = jnp.sum(jnp.where(mask, m_new, 0.0), axis=0, keepdims=True)  # m_new[idx]
    e_row = jnp.exp(jnp.minimum(gate_row - gathered, 0.0))               # (1, tile_n)
    p = jnp.where(mask, e_row, 0.0)                                      # (B_pad, tile_n)

    # ---- rescale running state and accumulate (transpose-free MXU scatter) ----
    if scatter_bf16:
        contrib = jnp.dot(p.astype(jnp.bfloat16), xt.astype(jnp.bfloat16),
                          preferred_element_type=jnp.float32)
    else:
        contrib = jnp.dot(p, xt, preferred_element_type=jnp.float32)     # (B_pad, C_out_pad)
    l_ref[...] = corr * l_ref[...] + jnp.sum(p, axis=-1, keepdims=True)
    out_ref[...] = corr * out_ref[...] + contrib

    @pl.when(i == n_steps - 1)
    def _finalize():
        # Exact divide: only B_pad values, executed once — no approx reciprocal needed.
        inv_l = 1.0 / (l_ref[...] + 1e-16)                               # (B_pad, 1)
        out_ref[...] = out_ref[...] * inv_l


def attentional_graph_aggregation(x, index, params, dim_size, *, tile_n=2048,
                                  vmem_limit_bytes=64 * 1024 * 1024,
                                  scatter_bf16=False):
    """x: (N, C_in) f32, index: (N,) int, dim_size: static int -> (dim_size, C_out) f32.

    Indices >= dim_size are silently dropped (segment_sum semantics; PyTorch scatter would
    raise on out-of-range indices). x/fused weights ride the MXU in bf16 with f32 accum.
    tile_n: requested node-tile size (multiple of 128); auto-shrunk to fit the VMEM budget.
    vmem_limit_bytes: 64 MiB default is safe on v5e/v6e/v7x; pass 96 MiB on v5e/v6e for
    even larger tiles. Set scatter_bf16=True for ~3-4x MXU throughput on the scatter matmul
    at ~4e-3 extra relative error.
    """
    n, c_in = x.shape
    c_hid = params["w1"].shape[1]
    c_out = params["wt"].shape[1]

    c_hid_pad = _round_up(c_hid, 128)
    c_out_pad = _round_up(c_out, 128)
    cols = c_hid_pad + c_out_pad
    b_pad = _round_up(max(dim_size, 8), 8)
    tile_n = _fit_tile_n(tile_n, n, c_in, cols, b_pad, c_out_pad, vmem_limit_bytes)

    f32 = jnp.float32
    # Fused, lane-padded weights (built host-side once): [gate-hidden | transform], bf16.
    w1p = jnp.zeros((c_in, c_hid_pad), f32).at[:, :c_hid].set(params["w1"])
    wtp = jnp.zeros((c_in, c_out_pad), f32).at[:, :c_out].set(params["wt"])
    w_cat = jnp.concatenate([w1p, wtp], axis=1).astype(jnp.bfloat16)     # (C_in, Chp+Cop)
    b1p = jnp.zeros((1, c_hid_pad), f32).at[:, :c_hid].set(params["b1"])
    btp = jnp.zeros((1, c_out_pad), f32).at[:, :c_out].set(params["bt"])
    b_cat = jnp.concatenate([b1p, btp], axis=1)                          # (1, Chp+Cop) f32
    # Second gate linear as a row vector; padded to 8 sublane rows (row 0 real, rest 0).
    w2_row = jnp.zeros((8, c_hid_pad), f32).at[0, :c_hid].set(params["w2"][:, 0])
    b2 = params["b2"].reshape(1, 1).astype(f32)

    # x is passed in its native f32 layout (no wrapper pad/cast pass over x).
    x = x.astype(f32)
    idx_row = index.reshape(1, n).astype(jnp.int32)                      # tiny reshape only

    grid = (pl.cdiv(n, tile_n),)
    kernel = functools.partial(_attn_agg_kernel, n_total=n, scatter_bf16=scatter_bf16)

    out = pl.pallas_call(
        kernel,
        out_shape=jax.ShapeDtypeStruct((b_pad, c_out_pad), jnp.float32),
        grid=grid,
        in_specs=[
            pl.BlockSpec((tile_n, c_in), lambda i: (i, 0)),              # x tile (ragged ok)
            pl.BlockSpec((1, tile_n), lambda i: (0, i)),                 # index tile (lanes)
            pl.BlockSpec((c_in, cols), lambda i: (0, 0)),                # fused weight (resident)
            pl.BlockSpec((1, cols), lambda i: (0, 0)),                   # fused bias
            pl.BlockSpec((8, c_hid_pad), lambda i: (0, 0)),              # gate second linear
            pl.BlockSpec((1, 1), lambda i: (0, 0)),                      # gate second bias
        ],
        out_specs=pl.BlockSpec((b_pad, c_out_pad), lambda i: (0, 0)),    # resident accumulator
        scratch_shapes=[
            pltpu.VMEM((b_pad, 1), jnp.float32),                         # running segment max
            pltpu.VMEM((b_pad, 1), jnp.float32),                         # running segment denom
        ],
        compiler_params=pltpu.CompilerParams(
            dimension_semantics=("arbitrary",),                          # carried softmax state
            vmem_limit_bytes=vmem_limit_bytes,
        ),
    )(x, idx_row, w_cat, b_cat, w2_row, b2)

    return out[:dim_size, :c_out]


def _init_params(key, c_in, c_out):
    """Deterministic PyTorch-Linear-style init (uniform +- 1/sqrt(fan_in)); weights stored (in, out)."""
    c_hid = c_in // 2
    ks = jax.random.split(key, 6)

    def lin(kw, kb, fan_in, fan_out):
        bound = 1.0 / jnp.sqrt(fan_in)
        w = jax.random.uniform(kw, (fan_in, fan_out), jnp.float32, -bound, bound)
        b = jax.random.uniform(kb, (1, fan_out), jnp.float32, -bound, bound)
        return w, b

    w1, b1 = lin(ks[0], ks[1], c_in, c_hid)
    w2, b2 = lin(ks[2], ks[3], c_hid, 1)
    wt, bt = lin(ks[4], ks[5], c_in, c_out)
    return dict(w1=w1, b1=b1, w2=w2, b2=b2, wt=wt, bt=bt)


def _reference(x, index, params, dim_size):
    """Pure-JAX reference. Mirrors the kernel's numerics: inputs to the big x-matmuls are
    rounded to bf16 (MXU-native), accumulation and all softmax math stay f32."""
    rd = lambda a: a.astype(jnp.bfloat16).astype(jnp.float32)
    xr = rd(x)
    h = jnp.maximum(xr @ rd(params["w1"]) + params["b1"], 0.0)
    gate = (h @ params["w2"] + params["b2"])[:, 0]                       # (N,)
    xt = jnp.maximum(xr @ rd(params["wt"]) + params["bt"], 0.0)          # (N, C_out)
    seg_max = jax.ops.segment_max(gate, index, num_segments=dim_size)
    e = jnp.exp(gate - seg_max[index])
    denom = jax.ops.segment_sum(e, index, num_segments=dim_size)
    alpha = e / (denom[index] + 1e-16)
    return jax.ops.segment_sum(alpha[:, None] * xt, index, num_segments=dim_size)


if __name__ == "__main__":
    C_IN, C_OUT, B = 32, 16, 8
    key = jax.random.PRNGKey(0)
    k_x1, k_i1, k_x2, k_i2, k_p = jax.random.split(key, 5)
    params = _init_params(k_p, C_IN, C_OUT)

    # Case 1: N a multiple of tile_n -> exercises the multi-tile online-softmax carry (2 steps).
    N1 = 256
    x1 = jax.random.normal(k_x1, (N1, C_IN), jnp.float32)
    idx1 = jax.random.randint(k_i1, (N1,), 0, B, jnp.int32)
    out1 = jax.block_until_ready(attentional_graph_aggregation(x1, idx1, params, B, tile_n=128))
    ref1 = _reference(x1, idx1, params, B)
    assert out1.shape == (B, C_OUT)
    err1 = float(jnp.max(jnp.abs(out1 - ref1)))
    assert jnp.allclose(out1, ref1, atol=5e-3, rtol=5e-3), f"case1 mismatch (max abs err {err1})"

    # Case 2: ragged N (not a multiple of 128) -> exercises in-kernel last-tile masking
    # (no wrapper-side padding of x anymore).
    N2 = 300
    x2 = jax.random.normal(k_x2, (N2, C_IN), jnp.float32)
    idx2 = jax.random.randint(k_i2, (N2,), 0, B, jnp.int32)
    out2 = jax.block_until_ready(attentional_graph_aggregation(x2, idx2, params, B, tile_n=128))
    ref2 = _reference(x2, idx2, params, B)
    err2 = float(jnp.max(jnp.abs(out2 - ref2)))
    assert jnp.allclose(out2, ref2, atol=5e-3, rtol=5e-3), f"case2 mismatch (max abs err {err2})"

    print("KERNEL_OK")
</pallas_src>

<mosaic_0001>
module attributes {stable_mosaic.version = 11 : i64} {
  func.func @_attn_agg_kernel(%arg0: i32, %arg1: memref<128x32xf32, #tpu.memory_space<vmem>>, %arg2: memref<1x128xi32, #tpu.memory_space<vmem>>, %arg3: memref<32x256xbf16, #tpu.memory_space<vmem>>, %arg4: memref<1x256xf32, #tpu.memory_space<vmem>>, %arg5: memref<8x128xf32, #tpu.memory_space<vmem>>, %arg6: memref<1x1xf32, #tpu.memory_space<vmem>>, %arg7: memref<8x128xf32, #tpu.memory_space<vmem>>, %arg8: memref<8x1xf32, #tpu.memory_space<vmem>>, %arg9: memref<8x1xf32, #tpu.memory_space<vmem>>) attributes {dimension_semantics = [#tpu.dimension_semantics<arbitrary>], iteration_bounds = array<i64: 2>, scalar_prefetch = 0 : i64, scratch_operands = 2 : i64, tpu.core_type = #tpu.core_type<tc>, window_params = [{transform_indices = @transform_0, window_bounds = array<i64: 128, 32>}, {transform_indices = @transform_1, window_bounds = array<i64: 1, 128>}, {pipeline_mode = #tpu.pipeline_mode<synchronous>, transform_indices = @transform_2, window_bounds = array<i64: 32, 256>}, {pipeline_mode = #tpu.pipeline_mode<synchronous>, transform_indices = @transform_3, window_bounds = array<i64: 1, 256>}, {pipeline_mode = #tpu.pipeline_mode<synchronous>, transform_indices = @transform_4, window_bounds = array<i64: 8, 128>}, {pipeline_mode = #tpu.pipeline_mode<synchronous>, transform_indices = @transform_5, window_bounds = array<i64: 1, 1>}, {pipeline_mode = #tpu.pipeline_mode<synchronous>, transform_indices = @transform_6, window_bounds = array<i64: 8, 128>}]} {
    %c0_i32 = arith.constant 0 : i32
    %0 = arith.cmpi eq, %arg0, %c0_i32 : i32
    %1 = arith.extui %0 : i1 to i32
    %c0_i32_0 = arith.constant 0 : i32
    %2 = arith.cmpi ne, %1, %c0_i32_0 : i32
    scf.if %2 {
      %cst_35 = arith.constant -1.000000e+30 : f32
      %64 = vector.broadcast %cst_35 : f32 to vector<8x1xf32>
      %c0_36 = arith.constant 0 : index
      %c0_37 = arith.constant 0 : index
      %65 = vector.load %arg8[%c0_36, %c0_37] : memref<8x1xf32, #tpu.memory_space<vmem>>, vector<8x1xf32>
      tpu.vector_store %arg8[%c0_36, %c0_37], %64 {strides = array<i32>} : memref<8x1xf32, #tpu.memory_space<vmem>>, vector<8x1xf32>,
      %cst_38 = arith.constant 0.000000e+00 : f32
      %66 = vector.broadcast %cst_38 : f32 to vector<8x1xf32>
      %c0_39 = arith.constant 0 : index
      %c0_40 = arith.constant 0 : index
      %67 = vector.load %arg9[%c0_39, %c0_40] : memref<8x1xf32, #tpu.memory_space<vmem>>, vector<8x1xf32>
      tpu.vector_store %arg9[%c0_39, %c0_40], %66 {strides = array<i32>} : memref<8x1xf32, #tpu.memory_space<vmem>>, vector<8x1xf32>,
      %cst_41 = arith.constant 0.000000e+00 : f32
      %68 = vector.broadcast %cst_41 : f32 to vector<8x128xf32>
      %c0_42 = arith.constant 0 : index
      %c0_43 = arith.constant 0 : index
      %69 = vector.load %arg7[%c0_42, %c0_43] : memref<8x128xf32, #tpu.memory_space<vmem>>, vector<8x128xf32>
      tpu.vector_store %arg7[%c0_42, %c0_43], %68 {strides = array<i32>} : memref<8x128xf32, #tpu.memory_space<vmem>>, vector<8x128xf32>,
    } else {
    }
    %c0 = arith.constant 0 : index
    %c0_1 = arith.constant 0 : index
    %3 = vector.load %arg1[%c0, %c0_1] : memref<128x32xf32, #tpu.memory_space<vmem>>, vector<128x32xf32>
    %4 = arith.truncf %3 : vector<128x32xf32> to vector<128x32xbf16>
    %c0_2 = arith.constant 0 : index
    %c0_3 = arith.constant 0 : index
    %5 = vector.load %arg3[%c0_2, %c0_3] : memref<32x256xbf16, #tpu.memory_space<vmem>>, vector<32x256xbf16>
    %cst = arith.constant dense<0.000000e+00> : vector<128x256xf32>
    %6 = tpu.matmul %4, %5, %cst {dimension_numbers = #tpu.dot_dimension_numbers<[1], [0], [0], [1], [0, 0, 1, 1], [], []>} : vector<128x32xbf16>, vector<32x256xbf16>, vector<128x256xf32> -> vector<128x256xf32>
    %c0_4 = arith.constant 0 : index
    %c0_5 = arith.constant 0 : index
    %7 = vector.load %arg4[%c0_4, %c0_5] : memref<1x256xf32, #tpu.memory_space<vmem>>, vector<1x256xf32>
    %8 = vector.broadcast %7 : vector<1x256xf32> to vector<128x256xf32>
    %9 = arith.addf %6, %8 : vector<128x256xf32>
    %cst_6 = arith.constant 0.000000e+00 : f32
    %10 = vector.broadcast %cst_6 : f32 to vector<128x256xf32>
    %11 = arith.maximumf %9, %10 : vector<128x256xf32>
    %12 = vector.extract_strided_slice %11 {offsets = [0, 0], sizes = [128, 128], strides = [1, 1]} : vector<128x256xf32> to vector<128x128xf32>
    %13 = vector.extract_strided_slice %11 {offsets = [0, 128], sizes = [128, 128], strides = [1, 1]} : vector<128x256xf32> to vector<128x128xf32>
    %c0_7 = arith.constant 0 : index
    %c0_8 = arith.constant 0 : index
    %14 = vector.load %arg5[%c0_7, %c0_8] : memref<8x128xf32, #tpu.memory_space<vmem>>, vector<8x128xf32>
    %cst_9 = arith.constant dense<0.000000e+00> : vector<8x128xf32>
    %15 = tpu.matmul %14, %12, %cst_9 {dimension_numbers = #tpu.dot_dimension_numbers<[1], [1], [0], [0], [0, 0, 1, 0], [], []>} : vector<8x128xf32>, vector<128x128xf32>, vector<8x128xf32> -> vector<8x128xf32>
    %16 = vector.extract_strided_slice %15 {offsets = [0, 0], sizes = [1, 128], strides = [1, 1]} : vector<8x128xf32> to vector<1x128xf32>
    %c0_10 = arith.constant 0 : index
    %c0_11 = arith.constant 0 : index
    %17 = vector.load %arg6[%c0_10, %c0_11] : memref<1x1xf32, #tpu.memory_space<vmem>>, vector<1x1xf32>
    %18 = vector.broadcast %17 : vector<1x1xf32> to vector<1x128xf32>
    %19 = arith.addf %16, %18 : vector<1x128xf32>
    %20 = tpu.iota {dimensions = array<i32: 0>} : vector<8x128xi32>
    %c0_12 = arith.constant 0 : index
    %c0_13 = arith.constant 0 : index
    %21 = vector.load %arg2[%c0_12, %c0_13] : memref<1x128xi32, #tpu.memory_space<vmem>>, vector<1x128xi32>
    %22 = vector.broadcast %21 : vector<1x128xi32> to vector<8x128xi32>
    %23 = arith.cmpi eq, %20, %22 : vector<8x128xi32>
    %cst_14 = arith.constant -1.000000e+30 : f32
    %24 = vector.shape_cast %19 : vector<1x128xf32> to vector<1x128xf32>
    %25 = vector.broadcast %24 : vector<1x128xf32> to vector<8x128xf32>
    %26 = vector.broadcast %cst_14 : f32 to vector<8x128xf32>
    %27 = arith.select %23, %25, %26 : vector<8x128xi1>, vector<8x128xf32>
    %cst_15 = arith.constant dense<0xFF800000> : vector<8xf32>
    %28 = vector.multi_reduction <maximumf>, %27, %cst_15 [1] : vector<8x128xf32> to vector<8xf32>
    %29 = vector.shape_cast %28 : vector<8xf32> to vector<8x1xf32>
    %c0_16 = arith.constant 0 : index
    %c0_17 = arith.constant 0 : index
    %30 = vector.load %arg8[%c0_16, %c0_17] : memref<8x1xf32, #tpu.memory_space<vmem>>, vector<8x1xf32>
    %31 = arith.maximumf %30, %29 : vector<8x1xf32>
    %32 = arith.subf %30, %31 : vector<8x1xf32>
    %33 = math.exp %32 : vector<8x1xf32>
    %c0_18 = arith.constant 0 : index
    %c0_19 = arith.constant 0 : index
    %34 = vector.load %arg8[%c0_18, %c0_19] : memref<8x1xf32, #tpu.memory_space<vmem>>, vector<8x1xf32>
    tpu.vector_store %arg8[%c0_18, %c0_19], %31 {strides = array<i32>} : memref<8x1xf32, #tpu.memory_space<vmem>>, vector<8x1xf32>,
    %cst_20 = arith.constant 0.000000e+00 : f32
    %35 = vector.shape_cast %31 : vector<8x1xf32> to vector<8x1xf32>
    %36 = vector.broadcast %35 : vector<8x1xf32> to vector<8x128xf32>
    %37 = vector.broadcast %cst_20 : f32 to vector<8x128xf32>
    %38 = arith.select %23, %36, %37 : vector<8x128xi1>, vector<8x128xf32>
    %cst_21 = arith.constant dense<0.000000e+00> : vector<128xf32>
    %39 = vector.multi_reduction <add>, %38, %cst_21 [0] : vector<8x128xf32> to vector<128xf32>
    %40 = vector.shape_cast %39 : vector<128xf32> to vector<1x128xf32>
    %41 = arith.subf %19, %40 : vector<1x128xf32>
    %cst_22 = arith.constant 0.000000e+00 : f32
    %42 = vector.broadcast %cst_22 : f32 to vector<1x128xf32>
    %43 = arith.minimumf %41, %42 : vector<1x128xf32>
    %44 = math.exp %43 : vector<1x128xf32>
    %cst_23 = arith.constant 0.000000e+00 : f32
    %45 = vector.shape_cast %44 : vector<1x128xf32> to vector<1x128xf32>
    %46 = vector.broadcast %45 : vector<1x128xf32> to vector<8x128xf32>
    %47 = vector.broadcast %cst_23 : f32 to vector<8x128xf32>
    %48 = arith.select %23, %46, %47 : vector<8x128xi1>, vector<8x128xf32>
    %cst_24 = arith.constant dense<0.000000e+00> : vector<8x128xf32>
    %49 = tpu.matmul %48, %13, %cst_24 {dimension_numbers = #tpu.dot_dimension_numbers<[1], [0], [0], [1], [0, 0, 1, 1], [], []>} : vector<8x128xf32>, vector<128x128xf32>, vector<8x128xf32> -> vector<8x128xf32>
    %c0_25 = arith.constant 0 : index
    %c0_26 = arith.constant 0 : index
    %50 = vector.load %arg9[%c0_25, %c0_26] : memref<8x1xf32, #tpu.memory_space<vmem>>, vector<8x1xf32>
    %51 = arith.mulf %33, %50 : vector<8x1xf32>
    %cst_27 = arith.constant dense<0.000000e+00> : vector<8xf32>
    %52 = vector.multi_reduction <add>, %48, %cst_27 [1] : vector<8x128xf32> to vector<8xf32>
    %53 = vector.shape_cast %52 : vector<8xf32> to vector<8x1xf32>
    %54 = arith.addf %51, %53 : vector<8x1xf32>
    %c0_28 = arith.constant 0 : index
    %c0_29 = arith.constant 0 : index
    %55 = vector.load %arg9[%c0_28, %c0_29] : memref<8x1xf32, #tpu.memory_space<vmem>>, vector<8x1xf32>
    tpu.vector_store %arg9[%c0_28, %c0_29], %54 {strides = array<i32>} : memref<8x1xf32, #tpu.memory_space<vmem>>, vector<8x1xf32>,
    %c0_30 = arith.constant 0 : index
    %c0_31 = arith.constant 0 : index
    %56 = vector.load %arg7[%c0_30, %c0_31] : memref<8x128xf32, #tpu.memory_space<vmem>>, vector<8x128xf32>
    %57 = vector.broadcast %33 : vector<8x1xf32> to vector<8x128xf32>
    %58 = arith.mulf %57, %56 : vector<8x128xf32>
    %59 = arith.addf %58, %49 : vector<8x128xf32>
    %c0_32 = arith.constant 0 : index
    %c0_33 = arith.constant 0 : index
    %60 = vector.load %arg7[%c0_32, %c0_33] : memref<8x128xf32, #tpu.memory_space<vmem>>, vector<8x128xf32>
    tpu.vector_store %arg7[%c0_32, %c0_33], %59 {strides = array<i32>} : memref<8x128xf32, #tpu.memory_space<vmem>>, vector<8x128xf32>,
    %c1_i32 = arith.constant 1 : i32
    %61 = arith.cmpi eq, %arg0, %c1_i32 : i32
    %62 = arith.extui %61 : i1 to i32
    %c0_i32_34 = arith.constant 0 : i32
    %63 = arith.cmpi ne, %62, %c0_i32_34 : i32
    scf.if %63 {
      %c0_35 = arith.constant 0 : index
      %c0_36 = arith.constant 0 : index
      %64 = vector.load %arg9[%c0_35, %c0_36] : memref<8x1xf32, #tpu.memory_space<vmem>>, vector<8x1xf32>
      %cst_37 = arith.constant 1.000000e-16 : f32
      %65 = vector.broadcast %cst_37 : f32 to vector<8x1xf32>
      %66 = arith.addf %64, %65 : vector<8x1xf32>
      %cst_38 = arith.constant 1.000000e+00 : f32
      %67 = vector.broadcast %cst_38 : f32 to vector<8x1xf32>
      %68 = arith.divf %67, %66 : vector<8x1xf32>
      %c0_39 = arith.constant 0 : index
      %c0_40 = arith.constant 0 : index
      %69 = vector.load %arg7[%c0_39, %c0_40] : memref<8x128xf32, #tpu.memory_space<vmem>>, vector<8x128xf32>
      %70 = vector.broadcast %68 : vector<8x1xf32> to vector<8x128xf32>
      %71 = arith.mulf %69, %70 : vector<8x128xf32>
      %c0_41 = arith.constant 0 : index
      %c0_42 = arith.constant 0 : index
      %72 = vector.load %arg7[%c0_41, %c0_42] : memref<8x128xf32, #tpu.memory_space<vmem>>, vector<8x128xf32>
      tpu.vector_store %arg7[%c0_41, %c0_42], %71 {strides = array<i32>} : memref<8x128xf32, #tpu.memory_space<vmem>>, vector<8x128xf32>,
    } else {
    }
    return
  }
  func.func @transform_0(%arg0: i32) -> (i32, i32) {
    %c0_i32 = arith.constant 0 : i32
    %c0_i32_0 = arith.constant 0 : i32
    return %arg0, %c0_i32 : i32, i32
  }
  func.func @transform_1(%arg0: i32) -> (i32, i32) {
    %c0_i32 = arith.constant 0 : i32
    %c0_i32_0 = arith.constant 0 : i32
    return %c0_i32, %arg0 : i32, i32
  }
  func.func @transform_2(%arg0: i32) -> (i32, i32) {
    %c0_i32 = arith.constant 0 : i32
    %c0_i32_0 = arith.constant 0 : i32
    %c0_i32_1 = arith.constant 0 : i32
    return %c0_i32, %c0_i32_0 : i32, i32
  }
  func.func @transform_3(%arg0: i32) -> (i32, i32) {
    %c0_i32 = arith.constant 0 : i32
    %c0_i32_0 = arith.constant 0 : i32
    %c0_i32_1 = arith.constant 0 : i32
    return %c0_i32, %c0_i32_0 : i32, i32
  }
  func.func @transform_4(%arg0: i32) -> (i32, i32) {
    %c0_i32 = arith.constant 0 : i32
    %c0_i32_0 = arith.constant 0 : i32
    %c0_i32_1 = arith.constant 0 : i32
    return %c0_i32, %c0_i32_0 : i32, i32
  }
  func.func @transform_5(%arg0: i32) -> (i32, i32) {
    %c0_i32 = arith.constant 0 : i32
    %c0_i32_0 = arith.constant 0 : i32
    %c0_i32_1 = arith.constant 0 : i32
    return %c0_i32, %c0_i32_0 : i32, i32
  }
  func.func @transform_6(%arg0: i32) -> (i32, i32) {
    %c0_i32 = arith.constant 0 : i32
    %c0_i32_0 = arith.constant 0 : i32
    %c0_i32_1 = arith.constant 0 : i32
    return %c0_i32, %c0_i32_0 : i32, i32
  }
}

</mosaic_0001>

<llo_original>
// kernel: tpu_custom_call.1
$region0: #{tpu_custom_call.1}
  #allocation0 [shape = 'u32[]', space=smem, size = 0x4, offset = 0x4, fixed_abs, tag = 'smem constant byte address 0x4 - core index']
  #allocation1 [shape = 'u32[144,128]{1,0:T(1,128)}', space=vmem, size = 0x12000, scoped, tag = 'internal scratch']
  #allocation2 [shape = 'f32[8,1]{1,0:T(8,128)}', space=vmem, size = 0x1000, scoped, tag = 'scratch operand']
  #allocation3 [shape = 'f32[8,1]{1,0:T(8,128)}', space=vmem, size = 0x1000, scoped, tag = 'scratch operand']
  #allocation4 [shape = 'f32[1,1]{1,0:T(1,128)S(1)}', space=vmem, size = 0x200, scoped, tag = 'scoped memory for tpu_custom_call.1']
  %s0 = inlined_call_operand.vmem [shape: f32[256,32], index: 0, kind: input, shape index: {}]
  %s1 = inlined_call_operand.vmem [shape: s32[1,256], index: 1, kind: input, shape index: {}]
  %s2 = inlined_call_operand.vmem [shape: bf16[32,256], index: 2, kind: input, shape index: {}]
  %s3 = inlined_call_operand.vmem [shape: f32[1,256], index: 3, kind: input, shape index: {}]
  %s4 = inlined_call_operand.vmem [shape: f32[8,128], index: 4, kind: input, shape index: {}]
  %s5 = inlined_call_operand.<no memory space> [shape: f32[1,1], index: 5, kind: input, shape index: {}]
  %s6 = inlined_call_operand.hbm [shape: f32[8,128], index: 6, kind: output, shape index: {}]
  %s7 = sld [smem:[#allocation0]]
  $region65: #{tpu_custom_call.1} parent=0
    _
  %s9 = ssub.s32 1, %s7
  %s10 = scalar_select 0, %s9, %s7
  %v11 = vstv %s5
  %12 = vst [vmem:[#allocation4] sm:$0x1] %v11
  $region1: #{tpu_custom_call.1} parent=0
    #allocation5 [shape = 'u8[4096]{0}', space=vmem, size = 0x1000, scoped, tag = 'output window, operand 0, single buffered']
    #allocation6 [shape = 's32[2]{0}', space=sflag, size = 0x8, scoped, tag = 'scoped memory for tpu_custom_call.1']
    %13 = vsyncpa [#allocation6], 0
    loop: start=0, step=1, limit=4
    $region2: #{tpu_custom_call.1} parent=1 // loop_pre_header
      _
    $region3: #{tpu_custom_call.1} parent=1 // loop_header
      %s15 = sphi 0, %s19
      %p16 = scmp.ge.s32.totalorder %s15, 4
      %s25 = sphi 0, %s27
      %s28 = sphi 0, %s25
      %s29 = sphi 0, %s28
      %s45 = sphi 0, %s29
      %s51 = sphi 0, %s53
      %s54 = sphi 0, %s51
      %s55 = sphi 0, %s54
      %s71 = sphi 0, %s55
      %s75 = sphi 0, %s75
      %s77 = sphi 0, %s75
      %s78 = sphi 0, %s77
      %s92 = sphi 0, %s78
      %s96 = sphi 0, %s96
      %s98 = sphi 0, %s96
      %s99 = sphi 0, %s98
      %s113 = sphi 0, %s99
      %s117 = sphi 0, %s117
      %s119 = sphi 0, %s117
      %s120 = sphi 0, %s119
      %s134 = sphi 0, %s120
      %s138 = sphi 0, %s138
      %s140 = sphi 0, %s138
      %s141 = sphi 0, %s140
      %s155 = sphi 0, %s141
      %s159 = sphi 0, %s159
      %s161 = sphi 0, %s159
      %s162 = sphi 0, %s161
      %s176 = sphi 0, %s162
    $region4: #{tpu_custom_call.1} parent=1 // loop_header_branch
      %18 = sbr.rel (%p16) target = $region8
    $region5: #{tpu_custom_call.1} parent=1 // loop_body
      %s20 = ssub.s32 %s15, 1
      %s21 = ssub.s32 %s15, 2
      %s22 = sadd.s32 %s15, 1
      %s23 = ssub.s32 %s15, %s22
      %p24 = scmp.eq.s32.totalorder %s23, 0
      %s26 = sadd.s32 %s25, 1
      %s27 = scalar_select %p24, %s25, %s26
      %p30 = pneg %p24
      %p31 = scmp.eq.s32.totalorder %s15, 1
      %p32 = por %p30, %p31
      %p33 = scmp.ne.s32.totalorder %s25, %s28
      %p34 = scmp.eq.s32.totalorder %s15, 0
      %p35 = por %p33, %p34
      %p36 = scmp.ne.s32.totalorder %s25, %s28
      %p37 = scmp.eq.s32.totalorder %s20, 1
      %p38 = por %p36, %p37
      %p39 = scmp.ne.s32.totalorder %s28, %s29
      %p40 = scmp.eq.s32.totalorder %s20, 0
      %p41 = por %p39, %p40
      %p42 = scmp.ne.s32.totalorder %s28, %s29
      %p43 = scmp.eq.s32.totalorder %s21, 1
      %p44 = por %p42, %p43
      %p46 = scmp.ne.s32.totalorder %s29, %s45
      %p47 = scmp.eq.s32.totalorder %s21, 0
      %p48 = por %p46, %p47
      %s49 = ssub.s32 %s15, %s22
      %p50 = scmp.eq.s32.totalorder %s49, 0
      %s52 = sadd.s32 %s51, 1
      %s53 = scalar_select %p50, %s51, %s52
      %p56 = pneg %p50
      %p57 = scmp.eq.s32.totalorder %s15, 1
      %p58 = por %p56, %p57
      %p59 = scmp.ne.s32.totalorder %s51, %s54
      %p60 = scmp.eq.s32.totalorder %s15, 0
      %p61 = por %p59, %p60
      %p62 = scmp.ne.s32.totalorder %s51, %s54
      %p63 = scmp.eq.s32.totalorder %s20, 1
      %p64 = por %p62, %p63
      %p65 = scmp.ne.s32.totalorder %s54, %s55
      %p66 = scmp.eq.s32.totalorder %s20, 0
      %p67 = por %p65, %p66
      %p68 = scmp.ne.s32.totalorder %s54, %s55
      %p69 = scmp.eq.s32.totalorder %s21, 1
      %p70 = por %p68, %p69
      %p72 = scmp.ne.s32.totalorder %s55, %s71
      %p73 = scmp.eq.s32.totalorder %s21, 0
      %p74 = por %p72, %p73
      %s76 = sadd.s32 %s75, 1
      %p79 = scmp.eq.s32.totalorder %s15, 1
      %p80 = scmp.ne.s32.totalorder %s75, %s77
      %p81 = scmp.eq.s32.totalorder %s15, 0
      %p82 = por %p80, %p81
      %p83 = scmp.ne.s32.totalorder %s75, %s77
      %p84 = scmp.eq.s32.totalorder %s20, 1
      %p85 = por %p83, %p84
      %p86 = scmp.ne.s32.totalorder %s77, %s78
      %p87 = scmp.eq.s32.totalorder %s20, 0
      %p88 = por %p86, %p87
      %p89 = scmp.ne.s32.totalorder %s77, %s78
      %p90 = scmp.eq.s32.totalorder %s21, 1
      %p91 = por %p89, %p90
      %p93 = scmp.ne.s32.totalorder %s78, %s92
      %p94 = scmp.eq.s32.totalorder %s21, 0
      %p95 = por %p93, %p94
      %s97 = sadd.s32 %s96, 1
      %p100 = scmp.eq.s32.totalorder %s15, 1
      %p101 = scmp.ne.s32.totalorder %s96, %s98
      %p102 = scmp.eq.s32.totalorder %s15, 0
      %p103 = por %p101, %p102
      %p104 = scmp.ne.s32.totalorder %s96, %s98
      %p105 = scmp.eq.s32.totalorder %s20, 1
      %p106 = por %p104, %p105
      %p107 = scmp.ne.s32.totalorder %s98, %s99
      %p108 = scmp.eq.s32.totalorder %s20, 0
      %p109 = por %p107, %p108
      %p110 = scmp.ne.s32.totalorder %s98, %s99
      %p111 = scmp.eq.s32.totalorder %s21, 1
      %p112 = por %p110, %p111
      %p114 = scmp.ne.s32.totalorder %s99, %s113
      %p115 = scmp.eq.s32.totalorder %s21, 0
      %p116 = por %p114, %p115
      %s118 = sadd.s32 %s117, 1
      %p121 = scmp.eq.s32.totalorder %s15, 1
      %p122 = scmp.ne.s32.totalorder %s117, %s119
      %p123 = scmp.eq.s32.totalorder %s15, 0
      %p124 = por %p122, %p123
      %p125 = scmp.ne.s32.totalorder %s117, %s119
      %p126 = scmp.eq.s32.totalorder %s20, 1
      %p127 = por %p125, %p126
      %p128 = scmp.ne.s32.totalorder %s119, %s120
      %p129 = scmp.eq.s32.totalorder %s20, 0
      %p130 = por %p128, %p129
      %p131 = scmp.ne.s32.totalorder %s119, %s120
      %p132 = scmp.eq.s32.totalorder %s21, 1
      %p133 = por %p131, %p132
      %p135 = scmp.ne.s32.totalorder %s120, %s134
      %p136 = scmp.eq.s32.totalorder %s21, 0
      %p137 = por %p135, %p136
      %s139 = sadd.s32 %s138, 1
      %p142 = scmp.eq.s32.totalorder %s15, 1
      %p143 = scmp.ne.s32.totalorder %s138, %s140
      %p144 = scmp.eq.s32.totalorder %s15, 0
      %p145 = por %p143, %p144
      %p146 = scmp.ne.s32.totalorder %s138, %s140
      %p147 = scmp.eq.s32.totalorder %s20, 1
      %p148 = por %p146, %p147
      %p149 = scmp.ne.s32.totalorder %s140, %s141
      %p150 = scmp.eq.s32.totalorder %s20, 0
      %p151 = por %p149, %p150
      %p152 = scmp.ne.s32.totalorder %s140, %s141
      %p153 = scmp.eq.s32.totalorder %s21, 1
      %p154 = por %p152, %p153
      %p156 = scmp.ne.s32.totalorder %s141, %s155
      %p157 = scmp.eq.s32.totalorder %s21, 0
      %p158 = por %p156, %p157
      %s160 = sadd.s32 %s159, 1
      %p163 = scmp.eq.s32.totalorder %s15, 1
      %p164 = scmp.ne.s32.totalorder %s159, %s161
      %p165 = scmp.eq.s32.totalorder %s15, 0
      %p166 = por %p164, %p165
      %p167 = scmp.ne.s32.totalorder %s159, %s161
      %p168 = scmp.eq.s32.totalorder %s20, 1
      %p169 = por %p167, %p168
      %p170 = scmp.ne.s32.totalorder %s161, %s162
      %p171 = scmp.eq.s32.totalorder %s20, 0
      %p172 = por %p170, %p171
      %p173 = scmp.ne.s32.totalorder %s161, %s162
      %p174 = scmp.eq.s32.totalorder %s21, 1
      %p175 = por %p173, %p174
      %p177 = scmp.ne.s32.totalorder %s162, %s176
      %p178 = scmp.eq.s32.totalorder %s21, 0
      %p179 = por %p177, %p178
      %p180 = scmp.le.s32.totalorder 1, %s15
      %p181 = scmp.lt.s32.totalorder %s15, 3
      %p182 = pnand %p180, %p181
      %p183 = pneg %p182
      // Predicated region
      $region9: #{tpu_custom_call.1} parent=5 // pred_check
        _
      $region10: #{tpu_custom_call.1} parent=5 // pred_check_branch
        %185 = sbr.rel (%p182) target = $region12
      $region11: #{tpu_custom_call.1} parent=5 // pred_region
        %s186 = ssub.s32 %s15, 1
        // Predicated region
        $region13: #{tpu_custom_call.1} parent=11 // pred_check
          %p187 = pneg %p88
        $region14: #{tpu_custom_call.1} parent=11 // pred_check_branch
          %189 = sbr.rel (%p187) target = $region16
        $region15: #{tpu_custom_call.1} parent=11 // pred_region
          _
        $region16: #{tpu_custom_call.1} parent=11 // pred_fallthru
          _
        // Predicated region
        $region17: #{tpu_custom_call.1} parent=11 // pred_check
          %p190 = pneg %p109
        $region18: #{tpu_custom_call.1} parent=11 // pred_check_branch
          %192 = sbr.rel (%p190) target = $region20
        $region19: #{tpu_custom_call.1} parent=11 // pred_region
          _
        $region20: #{tpu_custom_call.1} parent=11 // pred_fallthru
          _
        // Predicated region
        $region21: #{tpu_custom_call.1} parent=11 // pred_check
          %p193 = pneg %p130
        $region22: #{tpu_custom_call.1} parent=11 // pred_check_branch
          %195 = sbr.rel (%p193) target = $region24
        $region23: #{tpu_custom_call.1} parent=11 // pred_region
          _
        $region24: #{tpu_custom_call.1} parent=11 // pred_fallthru
          _
        // Predicated region
        $region25: #{tpu_custom_call.1} parent=11 // pred_check
          %p196 = pneg %p151
        $region26: #{tpu_custom_call.1} parent=11 // pred_check_branch
          %198 = sbr.rel (%p196) target = $region28
        $region27: #{tpu_custom_call.1} parent=11 // pred_region
          _
        $region28: #{tpu_custom_call.1} parent=11 // pred_fallthru
          _
      $region12: #{tpu_custom_call.1} parent=5 // pred_fallthru
        _
      %p199 = scmp.lt.s32.totalorder %s15, 2
      // Predicated region
      $region29: #{tpu_custom_call.1} parent=5 // pred_check
        %p200 = pneg %p199
      $region30: #{tpu_custom_call.1} parent=5 // pred_check_branch
        %202 = sbr.rel (%p200) target = $region32
      $region31: #{tpu_custom_call.1} parent=5 // pred_region
        // Predicated region
        $region33: #{tpu_custom_call.1} parent=31 // pred_check
          %p203 = pneg %p35
        $region34: #{tpu_custom_call.1} parent=31 // pred_check_branch
          %205 = sbr.rel (%p203) target = $region36
        $region35: #{tpu_custom_call.1} parent=31 // pred_region
          %s206 = smul.u32 16, %s15
          %p207 = scmp.lt.s32.totalorder %s206, 31
          %s208 = scalar_select %p207, %s206, 31
          %s209 = smul.addr %s208, 8
          %s210 = scalar_lea.vmem %s0, %s209
          %s211 = smul.u32 16, %s15
        $region36: #{tpu_custom_call.1} parent=31 // pred_fallthru
          _
        // Predicated region
        $region37: #{tpu_custom_call.1} parent=31 // pred_check
          %p212 = pneg %p61
        $region38: #{tpu_custom_call.1} parent=31 // pred_check_branch
          %214 = sbr.rel (%p212) target = $region40
        $region39: #{tpu_custom_call.1} parent=31 // pred_region
          %p215 = scmp.lt.s32.totalorder %s15, 1
          %s216 = scalar_select %p215, %s15, 1
          %s217 = scalar_lea.vmem %s1, %s216
        $region40: #{tpu_custom_call.1} parent=31 // pred_fallthru
          _
      $region32: #{tpu_custom_call.1} parent=5 // pred_fallthru
        _
      %p218 = scmp.le.s32.totalorder 1, %s15
      %p219 = scmp.lt.s32.totalorder %s15, 3
      %p220 = pnand %p218, %p219
      %p221 = pneg %p220
      // Predicated region
      $region41: #{tpu_custom_call.1} parent=5 // pred_check
        _
      $region42: #{tpu_custom_call.1} parent=5 // pred_check_branch
        %223 = sbr.rel (%p220) target = $region44
      $region43: #{tpu_custom_call.1} parent=5 // pred_region
        %s224 = ssub.s32 %s15, 1
        %s225 = smul.u32 16, %s20
        %p226 = scmp.lt.s32.totalorder %s225, 31
        %s227 = scalar_select %p226, %s225, 31
        %s228 = smul.addr %s227, 8
        %s229 = scalar_lea.vmem %s0, %s228
        %p230 = pneg %p41
        %p231 = pneg %p38
        %p232 = scmp.lt.s32.totalorder %s20, 1
        %s233 = scalar_select %p232, %s20, 1
        %s234 = scalar_lea.vmem %s1, %s233
        %p235 = pneg %p67
        %p236 = pneg %p64
        %p237 = pneg %p88
        %p238 = pneg %p85
        %p239 = pneg %p109
        %p240 = pneg %p106
        %p241 = pneg %p130
        %p242 = pneg %p127
        %p243 = pneg %p151
        %p244 = pneg %p148
        %p245 = pneg %p172
        %p246 = pneg %p169
        %s247 = smul.u32 16, %s20
        %p248 = scmp.lt.s32.totalorder %s247, 31
        %s249 = scalar_select %p248, %s247, 31
        %s250 = smul.addr %s249, 8
        %s251 = scalar_lea.vmem %s0, %s250
        %s252 = smul.u32 16, %s20
        %p253 = scmp.lt.s32.totalorder %s20, 1
        %s254 = scalar_select %p253, %s20, 1
        %s255 = scalar_lea.vmem %s1, %s254
        %p257 = scmp.eq.s32.totalorder %s20, 0
        // Predicated region
        $region45: #{tpu_custom_call.1} parent=43 // pred_check
          %p258 = pneg %p257
        $region46: #{tpu_custom_call.1} parent=43 // pred_check_branch
          %260 = sbr.rel (%p258) target = $region48
        $region47: #{tpu_custom_call.1} parent=43 // pred_region
          %vm261 = vcmask 7168
          %262 = vst.msk [vmem:[#allocation2] sm:$0xff] %vm261, -1e+30
          %263 = vst.msk [vmem:[#allocation3] sm:$0xff] %vm261, 0.0
          %264 = vst [vmem:[#allocation5] sm:$0xff] 0.0
        $region48: #{tpu_custom_call.1} parent=43 // pred_fallthru
          _
        %v265 = vld [vmem:[%s251] sm:$0xff]
        %v266 = vld [vmem:[%s251 + $0x8] sm:$0xff]
        %v267 = vld [vmem:[%s251 + $0x10] sm:$0xff]
        %v268 = vld [vmem:[%s251 + $0x18] sm:$0xff]
        %v269 = vld [vmem:[%s251 + $0x20] sm:$0xff]
        %v270 = vld [vmem:[%s251 + $0x28] sm:$0xff]
        %v271 = vld [vmem:[%s251 + $0x30] sm:$0xff]
        %v272 = vld [vmem:[%s251 + $0x38] sm:$0xff]
        %v273 = vld [vmem:[%s251 + $0x40] sm:$0xff]
        %v274 = vld [vmem:[%s251 + $0x48] sm:$0xff]
        %v275 = vld [vmem:[%s251 + $0x50] sm:$0xff]
        %v276 = vld [vmem:[%s251 + $0x58] sm:$0xff]
        %v277 = vld [vmem:[%s251 + $0x60] sm:$0xff]
        %v278 = vld [vmem:[%s251 + $0x68] sm:$0xff]
        %v279 = vld [vmem:[%s251 + $0x70] sm:$0xff]
        %v280 = vld [vmem:[%s251 + $0x78] sm:$0xff]
        %v281 = vpack.c.bf16 %v266, %v265
        %v282 = vpack.c.bf16 %v268, %v267
        %v283 = vpack.c.bf16 %v270, %v269
        %v284 = vpack.c.bf16 %v272, %v271
        %v285 = vpack.c.bf16 %v274, %v273
        %v286 = vpack.c.bf16 %v276, %v275
        %v287 = vpack.c.bf16 %v278, %v277
        %v288 = vpack.c.bf16 %v280, %v279
        %v289 = vld [vmem:[%s2] sm:$0xff]
        %v290 = vld [vmem:[%s2 + $0x8] sm:$0xff]
        %v291 = vld [vmem:[%s2 + $0x10] sm:$0xff]
        %v292 = vld [vmem:[%s2 + $0x18] sm:$0xff]
        %v293 = vld [vmem:[%s3] sm:$0x3]
        %v295 = vlaneseq
        %v296 = vshrl.u32 %v295, 7
        %v297 = vsub.s32 0, %v296
        %v298 = vrot.slane %v293, %v297
        %v299 = vlaneseq
        %v300 = vshrl.u32 %v299, 7
        %v301 = vsub.s32 1, %v300
        %v302 = vrot.slane %v293, %v301
        %v309 = vunpack.c.l.b16 %v289
        %v310 = vunpack.c.h.b16 %v289
        %v311 = vunpack.c.l.b16 %v290
        %v312 = vunpack.c.h.b16 %v290
        %v313 = vunpack.c.l.b16 %v291
        %v314 = vunpack.c.h.b16 %v291
        %v315 = vunpack.c.l.b16 %v292
        %v316 = vunpack.c.h.b16 %v292
        %v317 = vpack.c.b16 %v311, %v309
        %v318 = vpack.c.b16 %v312, %v310
        %v319 = vpack.c.b16 %v315, %v313
        %v320 = vpack.c.b16 %v316, %v314
        %vm325 = vcmask 261120
        %v327 = vsel %vm325, %v281, 0
        %v330 = vsel %vm325, %v282, 0
        %v333 = vsel %vm325, %v283, 0
        %v336 = vsel %vm325, %v284, 0
        %v339 = vsel %vm325, %v285, 0
        %v342 = vsel %vm325, %v286, 0
        %v345 = vsel %vm325, %v287, 0
        %v348 = vsel %vm325, %v288, 0
        %350 = vmatprep.subr.bf16.mxu0 0
        %351 = vmatpush1.bf16.msra.mxu0 0
        %352 = vmatprep.subr.bf16.mxu0 0
        %353 = vmatpush1.bf16.msra.mxu0 0
        %354 = vmatprep.subr.bf16.mxu0 0
        %355 = vmatpush1.bf16.msra.mxu0 0
        %356 = vmatprep.subr.bf16.mxu0 0
        %357 = vmatpush1.bf16.msra.mxu0 0
        %358 = vmatprep.subr.bf16.mxu0 0
        %359 = vmatpush1.bf16.msra.mxu0 0
        %360 = vmatprep.subr.bf16.mxu0 0
        %361 = vmatpush1.bf16.msra.mxu0 0
        %362 = vmatprep.subr.bf16.mxu0 %v320
        %363 = vmatpush1.bf16.msra.mxu0 %v319
        %364 = vmatprep.subr.bf16.mxu0 %v318
        %365 = vmatpush1.bf16.msra.mxu0 %v317
        %366 = vmatprep.subr.bf16.mxu0 0
        %367 = vmatpush2.bf16.msra.mxu0 0
        %368 = vmatprep.subr.bf16.mxu0 0
        %369 = vmatpush2.bf16.msra.mxu0 0
        %370 = vmatprep.subr.bf16.mxu0 0
        %371 = vmatpush2.bf16.msra.mxu0 0
        %372 = vmatprep.subr.bf16.mxu0 0
        %373 = vmatpush2.bf16.msra.mxu0 0
        %374 = vmatprep.subr.bf16.mxu0 0
        %375 = vmatpush2.bf16.msra.mxu0 0
        %376 = vmatprep.subr.bf16.mxu0 0
        %377 = vmatpush2.bf16.msra.mxu0 0
        %378 = vmatprep.subr.bf16.mxu0 0
        %379 = vmatpush2.bf16.msra.mxu0 0
        %380 = vmatprep.subr.bf16.mxu0 0
        %381 = vmatpush2.bf16.msra.mxu0 0
        %382 = vmatprep.mubr.bf16.mxu0 0
        %383 = vmatmul.mubr.bf16.gmra.mxu0 %v327
        %v384 = vpop.f32.mrf.mxu0
        %v385 = vadd.f32 %v298, %v384
        %v386 = vpop.f32.mrf.mxu0
        %v387 = vadd.f32 %v302, %v386
        %v388 = vpop.f32.mrf.mxu0
        %v389 = vadd.f32 %v298, %v388
        %v390 = vpop.f32.mrf.mxu0
        %v391 = vadd.f32 %v302, %v390
        %392 = vmatprep.mubr.bf16.mxu0 0
        %393 = vmatmul.mubr.bf16.gmra.mxu0 %v330
        %v394 = vpop.f32.mrf.mxu0
        %v395 = vadd.f32 %v298, %v394
        %v396 = vpop.f32.mrf.mxu0
        %v397 = vadd.f32 %v302, %v396
        %v398 = vpop.f32.mrf.mxu0
        %v399 = vadd.f32 %v298, %v398
        %v400 = vpop.f32.mrf.mxu0
        %v401 = vadd.f32 %v302, %v400
        %402 = vmatprep.mubr.bf16.mxu0 0
        %403 = vmatmul.mubr.bf16.gmra.mxu0 %v333
        %v404 = vpop.f32.mrf.mxu0
        %v405 = vadd.f32 %v298, %v404
        %v406 = vpop.f32.mrf.mxu0
        %v407 = vadd.f32 %v302, %v406
        %v408 = vpop.f32.mrf.mxu0
        %v409 = vadd.f32 %v298, %v408
        %v410 = vpop.f32.mrf.mxu0
        %v411 = vadd.f32 %v302, %v410
        %412 = vmatprep.mubr.bf16.mxu0 0
        %413 = vmatmul.mubr.bf16.gmra.mxu0 %v336
        %v414 = vpop.f32.mrf.mxu0
        %v415 = vadd.f32 %v298, %v414
        %v416 = vpop.f32.mrf.mxu0
        %v417 = vadd.f32 %v302, %v416
        %v418 = vpop.f32.mrf.mxu0
        %v419 = vadd.f32 %v298, %v418
        %v420 = vpop.f32.mrf.mxu0
        %v421 = vadd.f32 %v302, %v420
        %422 = vmatprep.mubr.bf16.mxu0 0
        %423 = vmatmul.mubr.bf16.gmra.mxu0 %v339
        %v424 = vpop.f32.mrf.mxu0
        %v425 = vadd.f32 %v298, %v424
        %v426 = vpop.f32.mrf.mxu0
        %v427 = vadd.f32 %v302, %v426
        %v428 = vpop.f32.mrf.mxu0
        %v429 = vadd.f32 %v298, %v428
        %v430 = vpop.f32.mrf.mxu0
        %v431 = vadd.f32 %v302, %v430
        %432 = vmatprep.mubr.bf16.mxu0 0
        %433 = vmatmul.mubr.bf16.gmra.mxu0 %v342
        %v434 = vpop.f32.mrf.mxu0
        %v435 = vadd.f32 %v298, %v434
        %v436 = vpop.f32.mrf.mxu0
        %v437 = vadd.f32 %v302, %v436
        %v438 = vpop.f32.mrf.mxu0
        %v439 = vadd.f32 %v298, %v438
        %v440 = vpop.f32.mrf.mxu0
        %v441 = vadd.f32 %v302, %v440
        %442 = vmatprep.mubr.bf16.mxu0 0
        %443 = vmatmul.mubr.bf16.gmra.mxu0 %v345
        %v444 = vpop.f32.mrf.mxu0
        %v445 = vadd.f32 %v298, %v444
        %v446 = vpop.f32.mrf.mxu0
        %v447 = vadd.f32 %v302, %v446
        %v448 = vpop.f32.mrf.mxu0
        %v449 = vadd.f32 %v298, %v448
        %v450 = vpop.f32.mrf.mxu0
        %v451 = vadd.f32 %v302, %v450
        %452 = vmatprep.mubr.bf16.mxu0 0
        %453 = vmatmul.mubr.bf16.gmra.mxu0 %v348
        %v454 = vpop.f32.mrf.mxu0
        %v455 = vadd.f32 %v298, %v454
        %v456 = vpop.f32.mrf.mxu0
        %v457 = vadd.f32 %v302, %v456
        %v458 = vpop.f32.mrf.mxu0
        %v459 = vadd.f32 %v298, %v458
        %v460 = vpop.f32.mrf.mxu0
        %v461 = vadd.f32 %v302, %v460
        %462 = vdwg.mxu0
        %v463 = vmax.f32 %v385, 0.0
        %v464 = vmax.f32 %v387, 0.0
        %v465 = vmax.f32 %v389, 0.0
        %v466 = vmax.f32 %v391, 0.0
        %v467 = vmax.f32 %v395, 0.0
        %v468 = vmax.f32 %v397, 0.0
        %v469 = vmax.f32 %v399, 0.0
        %v470 = vmax.f32 %v401, 0.0
        %v471 = vmax.f32 %v405, 0.0
        %v472 = vmax.f32 %v407, 0.0
        %v473 = vmax.f32 %v409, 0.0
        %v474 = vmax.f32 %v411, 0.0
        %v475 = vmax.f32 %v415, 0.0
        %v476 = vmax.f32 %v417, 0.0
        %v477 = vmax.f32 %v419, 0.0
        %v478 = vmax.f32 %v421, 0.0
        %v479 = vmax.f32 %v425, 0.0
        %v480 = vmax.f32 %v427, 0.0
        %v481 = vmax.f32 %v429, 0.0
        %v482 = vmax.f32 %v431, 0.0
        %v483 = vmax.f32 %v435, 0.0
        %v484 = vmax.f32 %v437, 0.0
        %v485 = vmax.f32 %v439, 0.0
        %v486 = vmax.f32 %v441, 0.0
        %v487 = vmax.f32 %v445, 0.0
        %v488 = vmax.f32 %v447, 0.0
        %v489 = vmax.f32 %v449, 0.0
        %v490 = vmax.f32 %v451, 0.0
        %v491 = vmax.f32 %v455, 0.0
        %v492 = vmax.f32 %v457, 0.0
        %v493 = vmax.f32 %v459, 0.0
        %v494 = vmax.f32 %v461, 0.0
        %v495 = vld [vmem:[%s4] sm:$0xff]
        %496 = vmatprep.subr.mxu0 0.0
        %497 = vmatpush1.xpose.msra.mxu0 %v493
        %498 = vmatprep.subr.mxu0 0.0
        %499 = vmatpush1.xpose.msra.mxu0 %v491
        %500 = vmatprep.subr.mxu0 0.0
        %501 = vmatpush1.xpose.msra.mxu0 %v489
        %502 = vmatprep.subr.mxu0 0.0
        %503 = vmatpush1.xpose.msra.mxu0 %v487
        %504 = vmatprep.subr.mxu0 0.0
        %505 = vmatpush1.xpose.msra.mxu0 %v485
        %506 = vmatprep.subr.mxu0 0.0
        %507 = vmatpush1.xpose.msra.mxu0 %v483
        %508 = vmatprep.subr.mxu0 0.0
        %509 = vmatpush1.xpose.msra.mxu0 %v481
        %510 = vmatprep.subr.mxu0 0.0
        %511 = vmatpush1.xpose.msra.mxu0 %v479
        %512 = vmatprep.subr.mxu0 0.0
        %513 = vmatpush1.xpose.msra.mxu0 %v477
        %514 = vmatprep.subr.mxu0 0.0
        %515 = vmatpush1.xpose.msra.mxu0 %v475
        %516 = vmatprep.subr.mxu0 0.0
        %517 = vmatpush1.xpose.msra.mxu0 %v473
        %518 = vmatprep.subr.mxu0 0.0
        %519 = vmatpush1.xpose.msra.mxu0 %v471
        %520 = vmatprep.subr.mxu0 0.0
        %521 = vmatpush1.xpose.msra.mxu0 %v469
        %522 = vmatprep.subr.mxu0 0.0
        %523 = vmatpush1.xpose.msra.mxu0 %v467
        %524 = vmatprep.subr.mxu0 0.0
        %525 = vmatpush1.xpose.msra.mxu0 %v465
        %526 = vmatprep.subr.mxu0 0.0
        %527 = vmatpush1.xpose.msra.mxu0 %v463
        %528 = vmatprep.subr.mxu0 0.0
        %529 = vmatpush2.xpose.msra.mxu0 0.0
        %530 = vmatprep.subr.mxu0 0.0
        %531 = vmatpush2.xpose.msra.mxu0 0.0
        %532 = vmatprep.subr.mxu0 0.0
        %533 = vmatpush2.xpose.msra.mxu0 0.0
        %534 = vmatprep.subr.mxu0 0.0
        %535 = vmatpush2.xpose.msra.mxu0 0.0
        %536 = vmatprep.subr.mxu0 0.0
        %537 = vmatpush2.xpose.msra.mxu0 0.0
        %538 = vmatprep.subr.mxu0 0.0
        %539 = vmatpush2.xpose.msra.mxu0 0.0
        %540 = vmatprep.subr.mxu0 0.0
        %541 = vmatpush2.xpose.msra.mxu0 0.0
        %542 = vmatprep.subr.mxu0 0.0
        %543 = vmatpush2.xpose.msra.mxu0 0.0
        %544 = vmatprep.subr.mxu0 0.0
        %545 = vmatpush2.xpose.msra.mxu0 0.0
        %546 = vmatprep.subr.mxu0 0.0
        %547 = vmatpush2.xpose.msra.mxu0 0.0
        %548 = vmatprep.subr.mxu0 0.0
        %549 = vmatpush2.xpose.msra.mxu0 0.0
        %550 = vmatprep.subr.mxu0 0.0
        %551 = vmatpush2.xpose.msra.mxu0 0.0
        %552 = vmatprep.subr.mxu0 0.0
        %553 = vmatpush2.xpose.msra.mxu0 0.0
        %554 = vmatprep.subr.mxu0 0.0
        %555 = vmatpush2.xpose.msra.mxu0 0.0
        %556 = vmatprep.subr.mxu0 0.0
        %557 = vmatpush2.xpose.msra.mxu0 0.0
        %558 = vmatprep.subr.mxu0 0.0
        %559 = vmatpush2.xpose.msra.mxu0 0.0
        %560 = vmatprep.mubr.f32.mxu0 0.0
        %561 = vmatmul.mubr.f32.gmra.mxu0 %v495
        %v562 = vpop.f32.mrf.mxu0
        %v563 = vadd.f32 0.0, %v562
        %v564 = vpop.f32.mrf.mxu0
        %565 = vdwg.mxu0
        %v566 = vld [vmem:[#allocation4] sm:$0x1]
        %568 = vset.pattern.permute.xlu0 0
        %569 = vperm.xlu0 %568, %v566
        %v570 = vpop.permute.xlu0 %569
        %v572 = vlaneseq
        %v573 = vshrl.u32 %v572, 7
        %v574 = vsub.s32 0, %v573
        %v575 = vrot.slane %v570, %v574
        %v576 = vadd.f32 %v563, %v575
        %v577 = vlaneseq
        %v578 = vshrl.u32 %v577, 7
        %v579 = vld [vmem:[%s255] sm:$0x1]
        %v580 = vlaneseq
        %v581 = vshrl.u32 %v580, 7
        %v582 = vsub.s32 0, %v581
        %v583 = vrot.slane %v579, %v582
        %vm584 = vcmp.eq.s32.totalorder %v578, %v583
        %v585 = vlaneseq
        %v586 = vshrl.u32 %v585, 7
        %v587 = vsub.s32 0, %v586
        %v588 = vrot.slane %v576, %v587
        %v589 = vsel %vm584, %v588, -1e+30
        %590 = vmax.xlane.f32.xlu0 %v589
        %v591 = vpop.xlane.xlu0 %590
        %v592 = vld [vmem:[#allocation2] sm:$0xff]
        %v593 = vmax.f32 %v592, %v591
        %v594 = vsub.f32 %v592, %v593
        %v595 = vmul.f32 %v594, 1.442695
        %v596 = vpow.pop %v595
        %vm597 = vcmask 7168
        %598 = vst.msk [vmem:[#allocation2] sm:$0xff] %vm597, %v593
        %600 = vset.pattern.permute.xlu0 0
        %601 = vperm.xlu0 %600, %v593
        %v602 = vpop.permute.xlu0 %601
        %v604 = vsel %vm584, %v602, 0.0
        %v605 = vrot.slane %v604, 4
        %v606 = vadd.f32 %v604, %v605
        %v607 = vrot.slane %v606, 2
        %v608 = vadd.f32 %v606, %v607
        %v609 = vrot.slane %v608, 1
        %v610 = vadd.f32 %v608, %v609
        %v611 = vsub.f32 %v576, %v610
        %v612 = vmin.f32 %v611, 0.0
        %v613 = vmul.f32 %v612, 1.442695
        %v614 = vpow.pop %v613
        %v615 = vlaneseq
        %v616 = vshrl.u32 %v615, 7
        %v617 = vsub.s32 0, %v616
        %v618 = vrot.slane %v614, %v617
        %v619 = vsel %vm584, %v618, 0.0
        %620 = vmatprep.subr.mxu0 0.0
        %621 = vmatpush1.msra.mxu0 %v494
        %622 = vmatprep.subr.mxu0 0.0
        %623 = vmatpush1.msra.mxu0 %v492
        %624 = vmatprep.subr.mxu0 0.0
        %625 = vmatpush1.msra.mxu0 %v490
        %626 = vmatprep.subr.mxu0 0.0
        %627 = vmatpush1.msra.mxu0 %v488
        %628 = vmatprep.subr.mxu0 0.0
        %629 = vmatpush1.msra.mxu0 %v486
        %630 = vmatprep.subr.mxu0 0.0
        %631 = vmatpush1.msra.mxu0 %v484
        %632 = vmatprep.subr.mxu0 0.0
        %633 = vmatpush1.msra.mxu0 %v482
        %634 = vmatprep.subr.mxu0 0.0
        %635 = vmatpush1.msra.mxu0 %v480
        %636 = vmatprep.subr.mxu0 0.0
        %637 = vmatpush1.msra.mxu0 %v478
        %638 = vmatprep.subr.mxu0 0.0
        %639 = vmatpush1.msra.mxu0 %v476
        %640 = vmatprep.subr.mxu0 0.0
        %641 = vmatpush1.msra.mxu0 %v474
        %642 = vmatprep.subr.mxu0 0.0
        %643 = vmatpush1.msra.mxu0 %v472
        %644 = vmatprep.subr.mxu0 0.0
        %645 = vmatpush1.msra.mxu0 %v470
        %646 = vmatprep.subr.mxu0 0.0
        %647 = vmatpush1.msra.mxu0 %v468
        %648 = vmatprep.subr.mxu0 0.0
        %649 = vmatpush1.msra.mxu0 %v466
        %650 = vmatprep.subr.mxu0 0.0
        %651 = vmatpush1.msra.mxu0 %v464
        %652 = vmatprep.subr.mxu0 0.0
        %653 = vmatpush2.msra.mxu0 0.0
        %654 = vmatprep.subr.mxu0 0.0
        %655 = vmatpush2.msra.mxu0 0.0
        %656 = vmatprep.subr.mxu0 0.0
        %657 = vmatpush2.msra.mxu0 0.0
        %658 = vmatprep.subr.mxu0 0.0
        %659 = vmatpush2.msra.mxu0 0.0
        %660 = vmatprep.subr.mxu0 0.0
        %661 = vmatpush2.msra.mxu0 0.0
        %662 = vmatprep.subr.mxu0 0.0
        %663 = vmatpush2.msra.mxu0 0.0
        %664 = vmatprep.subr.mxu0 0.0
        %665 = vmatpush2.msra.mxu0 0.0
        %666 = vmatprep.subr.mxu0 0.0
        %667 = vmatpush2.msra.mxu0 0.0
        %668 = vmatprep.subr.mxu0 0.0
        %669 = vmatpush2.msra.mxu0 0.0
        %670 = vmatprep.subr.mxu0 0.0
        %671 = vmatpush2.msra.mxu0 0.0
        %672 = vmatprep.subr.mxu0 0.0
        %673 = vmatpush2.msra.mxu0 0.0
        %674 = vmatprep.subr.mxu0 0.0
        %675 = vmatpush2.msra.mxu0 0.0
        %676 = vmatprep.subr.mxu0 0.0
        %677 = vmatpush2.msra.mxu0 0.0
        %678 = vmatprep.subr.mxu0 0.0
        %679 = vmatpush2.msra.mxu0 0.0
        %680 = vmatprep.subr.mxu0 0.0
        %681 = vmatpush2.msra.mxu0 0.0
        %682 = vmatprep.subr.mxu0 0.0
        %683 = vmatpush2.msra.mxu0 0.0
        %684 = vmatprep.mubr.f32.mxu0 0.0
        %685 = vmatmul.mubr.f32.gmra.mxu0 %v619
        %v686 = vpop.f32.mrf.mxu0
        %v687 = vadd.f32 0.0, %v686
        %v688 = vpop.f32.mrf.mxu0
        %689 = vdwg.mxu0
        %v690 = vld [vmem:[#allocation3] sm:$0xff]
        %v691 = vmul.f32 %v596, %v690
        %692 = vadd.xlane.f32.xlu0 %v619
        %v693 = vpop.xlane.xlu0 %692
        %v694 = vadd.f32 %v691, %v693
        %695 = vst.msk [vmem:[#allocation3] sm:$0xff] %vm597, %v694
        %v696 = vld [vmem:[#allocation5] sm:$0xff]
        %698 = vset.pattern.permute.xlu0 0
        %699 = vperm.xlu0 %698, %v596
        %v700 = vpop.permute.xlu0 %699
        %v702 = vmul.f32 %v700, %v696
        %v703 = vadd.f32 %v702, %v687
        %704 = vst [vmem:[#allocation5] sm:$0xff] %v703
        %p705 = scmp.eq.s32.totalorder %s20, 1
        // Predicated region
        $region49: #{tpu_custom_call.1} parent=43 // pred_check
          %p706 = pneg %p705
        $region50: #{tpu_custom_call.1} parent=43 // pred_check_branch
          %708 = sbr.rel (%p706) target = $region52
        $region51: #{tpu_custom_call.1} parent=43 // pred_region
          %v709 = vld [vmem:[#allocation3] sm:$0xff]
          %v710 = vadd.f32 %v709, 1e-16
          %v711 = vrcp.pop %v710
          %v712 = vmul.f32 1.0, %v711
          %v713 = vld [vmem:[#allocation5] sm:$0xff]
          %715 = vset.pattern.permute.xlu0 0
          %716 = vperm.xlu0 %715, %v712
          %v717 = vpop.permute.xlu0 %716
          %v719 = vmul.f32 %v713, %v717
          %720 = vst [vmem:[#allocation5] sm:$0xff] %v719
        $region52: #{tpu_custom_call.1} parent=43 // pred_fallthru
          _
        // Predicated region
        $region53: #{tpu_custom_call.1} parent=43 // pred_check
          %p721 = pneg %p169
        $region54: #{tpu_custom_call.1} parent=43 // pred_check_branch
          %723 = sbr.rel (%p721) target = $region56
        $region55: #{tpu_custom_call.1} parent=43 // pred_region
          %s725 = ssub.s32 128, 128
          %726 = vsyncadd [#allocation6], %s725
          %s728 = sshll.u32 [#allocation5], 4
          %s729 = int_to_ptr.vmem [resolvable:$true] %s728
          %731 = dma.vmem_to_hbm [thread:$0]  %s729, 128, %s6, [#allocation6]
        $region56: #{tpu_custom_call.1} parent=43 // pred_fallthru
          _
        // Predicated region
        $region57: #{tpu_custom_call.1} parent=43 // pred_check
          %p732 = pneg %p169
        $region58: #{tpu_custom_call.1} parent=43 // pred_check_branch
          %734 = sbr.rel (%p732) target = $region60
        $region59: #{tpu_custom_call.1} parent=43 // pred_region
          %735 = dma.done [#allocation6], 128
        $region60: #{tpu_custom_call.1} parent=43 // pred_fallthru
          _
      $region44: #{tpu_custom_call.1} parent=5 // pred_fallthru
        _
      %p736 = scmp.le.s32.totalorder 2, %s15
      // Predicated region
      $region61: #{tpu_custom_call.1} parent=5 // pred_check
        %p737 = pneg %p736
      $region62: #{tpu_custom_call.1} parent=5 // pred_check_branch
        %739 = sbr.rel (%p737) target = $region64
      $region63: #{tpu_custom_call.1} parent=5 // pred_region
        %s740 = ssub.s32 %s15, 2
      $region64: #{tpu_custom_call.1} parent=5 // pred_fallthru
        _
    $region6: #{tpu_custom_call.1} parent=1 // loop_footer
      %s19 = sadd.s32 1, %s15
    $region7: #{tpu_custom_call.1} parent=1 // loop_footer_branch
      %14 = sbr.rel target = $region3
    $region8: #{tpu_custom_call.1} parent=1 // loop_exit
      _
    %741 = vsyncpa [#allocation6], 1
    %s742 = scalar_lea.sflag [#allocation6], 1
    %743 = vsyncpa %s742, 1

</llo_original>
